<compile_context>
chip_gen: v5e
topology: v5e:2x2
jax: 0.10.0
libtpu: 0.0.40
codegen_flags: <defaults>
</compile_context>

<pallas_src>
import functools
import math

import numpy as np
import jax
import jax.numpy as jnp
from jax import lax
from jax.experimental import pallas as pl
from jax.experimental.pallas import tpu as pltpu


K1 = 9            # conv1 kernel size
K2 = 5            # conv2 / conv3 kernel size
P1 = K1 // 2      # 4
P2 = K2 // 2      # 2
HALO_X1 = 2 * P2          # 4 : extra x1 rows needed above/below an output row tile
HALO_UP = P1 + HALO_X1    # 8 : extra upsampled rows needed above/below a tile


# ----------------------------------------------------------------------------
# Bicubic interpolation (PyTorch F.interpolate mode='bicubic',
# align_corners=False, A=-0.75) expressed as separable weight matrices.
# ----------------------------------------------------------------------------
def _bicubic_matrix(in_size: int, out_size: int, scale: float) -> np.ndarray:
    A = -0.75

    def cc1(u):  # |u| in [0, 1]
        return ((A + 2.0) * u - (A + 3.0)) * u * u + 1.0

    def cc2(u):  # |u| in [1, 2]
        return ((A * u - 5.0 * A) * u + 8.0 * A) * u - 4.0 * A

    inv = 1.0 / scale
    Wm = np.zeros((out_size, in_size), dtype=np.float64)
    for i in range(out_size):
        x = (i + 0.5) * inv - 0.5
        x0 = int(math.floor(x))
        t = x - x0
        coeffs = [cc2(t + 1.0), cc1(t), cc1(1.0 - t), cc2(2.0 - t)]
        for k in range(4):
            j = min(max(x0 - 1 + k, 0), in_size - 1)  # border replication
            Wm[i, j] += coeffs[k]
    return Wm.astype(np.float32)


# ----------------------------------------------------------------------------
# Resize kernel: two lane-dense matmuls per image.  The channel interleave is
# folded into the width matrix (kron(Ww^T, I_C)); zero rows/cols of the padded
# matrices produce the conv1 padding + row-tile halo for free.  Output bf16.
# ----------------------------------------------------------------------------
def _resize_kernel(x_ref, wh_ref, wwk_ref, o_ref):
    t = jnp.dot(x_ref[...], wwk_ref[...], preferred_element_type=jnp.float32)
    o_ref[...] = jnp.dot(wh_ref[...], t,
                         preferred_element_type=jnp.float32).astype(o_ref.dtype)


def bicubic_resize_padded(x_nchw, scale):
    """Returns the zero-padded, NHWC-lane-flat, bf16 upsampled slab.

    up_slab: (N, Ho + 2*HALO_UP, (Wo + 2*P1) * C); rows [HALO_UP, HALO_UP+Ho)
    and cols [P1*C, (P1+Wo)*C) hold the upsampled image, the border is zero.
    """
    N, C, H, W = x_nchw.shape
    Ho = int(math.floor(H * scale))
    Wo = int(math.floor(W * scale))
    Wh = _bicubic_matrix(H, Ho, scale)
    Ww = _bicubic_matrix(W, Wo, scale)

    Hp = Ho + 2 * HALO_UP
    Wp = Wo + 2 * P1

    wh_pad = np.zeros((Hp, H), np.float32)
    wh_pad[HALO_UP:HALO_UP + Ho] = Wh
    # TODO(synk): kron(Ww^T, I_C) is 2/3 zeros; run the width matmul
    #             per-channel for very large W to save VMEM / MXU work.
    wwk_pad = np.zeros((W * C, Wp * C), np.float32)
    wwk_pad[:, P1 * C:(P1 + Wo) * C] = np.kron(Ww.T, np.eye(C, dtype=np.float32))

    # NCHW -> (N, H, W*C): one tiny XLA transpose of the *low-res* input.
    x2d = jnp.transpose(x_nchw, (0, 2, 3, 1)).reshape(N, H, W * C)

    up = pl.pallas_call(
        _resize_kernel,
        out_shape=jax.ShapeDtypeStruct((N, Hp, Wp * C), jnp.bfloat16),
        grid=(N,),
        in_specs=[
            pl.BlockSpec((None, H, W * C), lambda n: (n, 0, 0)),
            pl.BlockSpec((Hp, H), lambda n: (0, 0)),
            pl.BlockSpec((W * C, Wp * C), lambda n: (0, 0)),
        ],
        out_specs=pl.BlockSpec((None, Hp, Wp * C), lambda n: (n, 0, 0)),
        compiler_params=pltpu.CompilerParams(
            dimension_semantics=("parallel",),
            vmem_limit_bytes=128 * 1024 * 1024),
    )(x2d, jnp.asarray(wh_pad), jnp.asarray(wwk_pad))

    return up, Ho, Wo, (jnp.asarray(Wh), jnp.asarray(Ww))


# ----------------------------------------------------------------------------
# Fused conv1(9x9)+ReLU -> conv2(5x5)+ReLU -> conv3(5x5) kernel, row-tiled.
# ----------------------------------------------------------------------------
def _fused_conv_kernel(up_ref, w1_ref, b1_ref, w2_ref, b2_ref,
                       w3a_ref, w3b_ref, b3_ref, id_ref, o_ref,
                       x1_pad, x2_pad, *, C, C1, C2, Cout, Ho, Wo, TR):
    f32 = jnp.float32
    rows_up = TR + 2 * HALO_UP     # upsampled rows needed by this tile
    rows_x1 = TR + 2 * HALO_X1     # conv1 output rows (= conv2 input incl. halo)
    rows_x2 = TR + 2 * P2          # conv2 output rows (= conv3 input incl. halo)

    r0 = pl.program_id(1) * TR                          # first output row of tile
    start = pl.multiple_of(r0, 8) if TR % 8 == 0 else r0

    # halo'd row window of the already zero-padded upsampled slab (bf16, lane-flat)
    up_win = up_ref[pl.ds(start, rows_up), :]           # (rows_up, (Wo+8)*C)

    # ---- conv1 9x9 + ReLU: ky taps grouped by 3 -> three K = 3*K1*C matmuls ----
    acc1 = jnp.zeros((rows_x1 * Wo, C1), f32)
    for g in range(3):
        pieces = []
        for dky in range(3):
            band = up_win[3 * g + dky: 3 * g + dky + rows_x1, :]
            for kx in range(K1):
                pieces.append(
                    band[:, kx * C:(kx + Wo) * C].reshape(rows_x1, Wo, C))
        pk = jnp.concatenate(pieces, axis=-1).reshape(rows_x1 * Wo, 3 * K1 * C)
        acc1 = acc1 + jnp.dot(pk, w1_ref[g], preferred_element_type=f32)
    y1 = jnp.maximum(acc1 + b1_ref[...], 0.0)

    # x1 rows outside the image are conv2's zero padding -> mask to zero.
    r1 = lax.broadcasted_iota(jnp.int32, (rows_x1, 1), 0) + (r0 - HALO_X1)
    y1 = jnp.where((r1 >= 0) & (r1 < Ho), y1.reshape(rows_x1, Wo * C1), 0.0)

    # width-zero-padded conv2 input scratch; only the tiny border strips are zeroed
    x1_pad[:, :P2 * C1] = jnp.zeros((rows_x1, P2 * C1), x1_pad.dtype)
    x1_pad[:, (P2 + Wo) * C1:] = jnp.zeros((rows_x1, P2 * C1), x1_pad.dtype)
    x1_pad[:, P2 * C1:(P2 + Wo) * C1] = y1.astype(x1_pad.dtype)

    # ---- conv2 5x5 + ReLU: per-ky-row matmuls, K = K2*C1 = 320 -----------------
    acc2 = jnp.zeros((rows_x2 * Wo, C2), f32)
    for ky in range(K2):
        band = x1_pad[ky: ky + rows_x2, :]
        pk = jnp.concatenate(
            [band[:, kx * C1:(kx + Wo) * C1].reshape(rows_x2, Wo, C1)
             for kx in range(K2)], axis=-1).reshape(rows_x2 * Wo, K2 * C1)
        acc2 = acc2 + jnp.dot(pk, w2_ref[ky], preferred_element_type=f32)
    y2 = jnp.maximum(acc2 + b2_ref[...], 0.0)

    r2 = lax.broadcasted_iota(jnp.int32, (rows_x2, 1), 0) + (r0 - P2)
    y2 = jnp.where((r2 >= 0) & (r2 < Ho), y2.reshape(rows_x2, Wo * C2), 0.0)

    x2_pad[:, :P2 * C2] = jnp.zeros((rows_x2, P2 * C2), x2_pad.dtype)
    x2_pad[:, (P2 + Wo) * C2:] = jnp.zeros((rows_x2, P2 * C2), x2_pad.dtype)
    x2_pad[:, P2 * C2:(P2 + Wo) * C2] = y2.astype(x2_pad.dtype)

    # ---- conv3 5x5: ky taps grouped {0,1,2}/{3,4} so every push has K >= 256 ---
    def conv3_group(ky0, nky, w_ref):
        pieces = []
        for dky in range(nky):
            band = x2_pad[ky0 + dky: ky0 + dky + TR, :]
            for kx in range(K2):
                pieces.append(
                    band[:, kx * C2:(kx + Wo) * C2].reshape(TR, Wo, C2))
        pk = jnp.concatenate(pieces, axis=-1).reshape(TR * Wo, nky * K2 * C2)
        return jnp.dot(pk, w_ref[...], preferred_element_type=f32)

    y3 = conv3_group(0, 3, w3a_ref) + conv3_group(3, 2, w3b_ref) + b3_ref[...]

    # Lane-dense NCHW output block: (Cout, TR*Wo) = I_Cout @ y3^T on the MXU.
    y3t = lax.dot_general(id_ref[...], y3, (((1,), (1,)), ((), ())),
                          preferred_element_type=f32)
    o_ref[...] = y3t.astype(o_ref.dtype)


def _pick_row_tile(Ho, Wo):
    budget = 16 << 20                     # ~16 MiB live per grid step (v7x-safe)
    per_row = max(1, Wo) * 2300           # rough bytes of live data per output row
    cap = min(Ho, max(8, budget // per_row))
    if cap >= Ho:
        return Ho
    cap -= cap % 8
    for t in range(cap, 7, -8):
        if Ho % t == 0 and (t * Wo) % 128 == 0:
            return t
    # TODO(synk): pad ragged Ho so a bounded row tile always exists.
    return Ho


def fused_convs(up_slab, params, Ho, Wo, row_tile=None):
    N = up_slab.shape[0]
    C = params["w1"].shape[2]
    C1 = params["w1"].shape[3]
    C2 = params["w2"].shape[3]
    Cout = params["w3"].shape[3]
    assert up_slab.shape[1] == Ho + 2 * HALO_UP
    assert up_slab.shape[2] == (Wo + 2 * P1) * C

    TR = _pick_row_tile(Ho, Wo) if row_tile is None else int(row_tile)
    assert Ho % TR == 0, (Ho, TR)
    assert TR == Ho or (TR % 8 == 0 and (TR * Wo) % 128 == 0), (TR, Wo)
    n_rt = Ho // TR

    bf16 = jnp.bfloat16
    w1g = params["w1"].reshape(3, 3 * K1 * C, C1).astype(bf16)       # (3, 81, 64)
    w2m = params["w2"].reshape(K2, K2 * C1, C2).astype(bf16)         # (5, 320, 32)
    w3a = params["w3"][:3].reshape(3 * K2 * C2, Cout).astype(bf16)   # (480, Cout)
    w3b = params["w3"][3:].reshape(2 * K2 * C2, Cout).astype(bf16)   # (320, Cout)
    b1 = params["b1"].reshape(1, C1).astype(jnp.float32)
    b2 = params["b2"].reshape(1, C2).astype(jnp.float32)
    b3 = params["b3"].reshape(1, Cout).astype(jnp.float32)
    ident = jnp.eye(Cout, dtype=jnp.float32)

    kernel = functools.partial(_fused_conv_kernel, C=C, C1=C1, C2=C2,
                               Cout=Cout, Ho=Ho, Wo=Wo, TR=TR)

    out = pl.pallas_call(
        kernel,
        out_shape=jax.ShapeDtypeStruct((N, Cout, Ho * Wo), jnp.float32),
        grid=(N, n_rt),
        in_specs=[
            pl.BlockSpec((None, Ho + 2 * HALO_UP, (Wo + 2 * P1) * C),
                         lambda n, r: (n, 0, 0)),
            pl.BlockSpec((3, 3 * K1 * C, C1), lambda n, r: (0, 0, 0)),
            pl.BlockSpec((1, C1), lambda n, r: (0, 0)),
            pl.BlockSpec((K2, K2 * C1, C2), lambda n, r: (0, 0, 0)),
            pl.BlockSpec((1, C2), lambda n, r: (0, 0)),
            pl.BlockSpec((3 * K2 * C2, Cout), lambda n, r: (0, 0)),
            pl.BlockSpec((2 * K2 * C2, Cout), lambda n, r: (0, 0)),
            pl.BlockSpec((1, Cout), lambda n, r: (0, 0)),
            pl.BlockSpec((Cout, Cout), lambda n, r: (0, 0)),
        ],
        out_specs=pl.BlockSpec((None, Cout, TR * Wo), lambda n, r: (n, 0, r)),
        scratch_shapes=[
            pltpu.VMEM((TR + 2 * HALO_X1, (Wo + 2 * P2) * C1), bf16),
            pltpu.VMEM((TR + 2 * P2, (Wo + 2 * P2) * C2), bf16),
        ],
        compiler_params=pltpu.CompilerParams(
            dimension_semantics=("parallel", "parallel"),
            vmem_limit_bytes=128 * 1024 * 1024),
    )(up_slab, w1g, b1, w2m, b2, w3a, w3b, b3, ident)

    return out.reshape(N, Cout, Ho, Wo)   # free reshape, already NCHW & lane-dense


# ----------------------------------------------------------------------------
# SRCNN forward
# ----------------------------------------------------------------------------
def init_params(key, in_channels, out_channels):
    ks = jax.random.split(key, 6)

    def conv_init(kw, kb, k, cin, cout):
        fan_in = k * k * cin
        w = jax.random.normal(kw, (k, k, cin, cout), jnp.float32) / math.sqrt(fan_in)
        b = 0.01 * jax.random.normal(kb, (cout,), jnp.float32)
        return w, b  # HWIO weights

    w1, b1 = conv_init(ks[0], ks[1], 9, in_channels, 64)
    w2, b2 = conv_init(ks[2], ks[3], 5, 64, 32)
    w3, b3 = conv_init(ks[4], ks[5], 5, 32, out_channels)
    return dict(w1=w1, b1=b1, w2=w2, b2=b2, w3=w3, b3=b3)


def srcnn_forward(x_nchw, params, scale, row_tile=None):
    up_slab, Ho, Wo, mats = bicubic_resize_padded(x_nchw, scale)
    out = fused_convs(up_slab, params, Ho, Wo, row_tile=row_tile)
    return out, mats


# ----------------------------------------------------------------------------
# Pure-JAX reference (same math: f32 bicubic, bf16 conv operands, f32 accum).
# ----------------------------------------------------------------------------
def srcnn_reference(x_nchw, params, mats):
    Wh, Ww = mats
    up = jnp.einsum("ip,ncpq,jq->ncij", Wh, x_nchw, Ww,
                    precision=lax.Precision.HIGHEST)
    h = jnp.transpose(up, (0, 2, 3, 1))  # NHWC

    def conv(x, w, b, relu):
        p = w.shape[0] // 2
        y = lax.conv_general_dilated(
            x.astype(jnp.bfloat16), w.astype(jnp.bfloat16),
            window_strides=(1, 1), padding=[(p, p), (p, p)],
            dimension_numbers=("NHWC", "HWIO", "NHWC"),
            preferred_element_type=jnp.float32) + b
        return jnp.maximum(y, 0.0) if relu else y

    h = conv(h, params["w1"], params["b1"], True)
    h = conv(h, params["w2"], params["b2"], True)
    h = conv(h, params["w3"], params["b3"], False)
    return jnp.transpose(h, (0, 3, 1, 2))


if __name__ == "__main__":
    scale = 2
    N, Cin, H, W = 2, 3, 16, 16
    out_channels = 3

    key = jax.random.PRNGKey(0)
    kx, kp = jax.random.split(key)
    x = jax.random.normal(kx, (N, Cin, H, W), jnp.float32)
    params = init_params(kp, Cin, out_channels)

    # row_tile=16 -> grid (2, 2): exercises the halo'd row tiling and the
    # top/bottom boundary masks of the fused kernel.
    out, mats = srcnn_forward(x, params, scale, row_tile=16)
    out = jax.block_until_ready(out)
    assert out.shape == (N, out_channels, H * scale, W * scale), out.shape

    ref = jax.block_until_ready(srcnn_reference(x, params, mats))
    out_np, ref_np = np.asarray(out), np.asarray(ref)
    if not np.allclose(out_np, ref_np, rtol=1e-2, atol=1e-2):
        raise AssertionError(
            "Pallas SRCNN output mismatch vs reference, max abs err = "
            f"{np.max(np.abs(out_np - ref_np))}")

    print("KERNEL_OK")
</pallas_src>

<mosaic_0001>
module attributes {stable_mosaic.version = 11 : i64} {
  func.func @_resize_kernel(%arg0: i32, %arg1: memref<1x16x48xf32, #tpu.memory_space<vmem>>, %arg2: memref<48x16xf32, #tpu.memory_space<vmem>>, %arg3: memref<48x120xf32, #tpu.memory_space<vmem>>, %arg4: memref<1x48x120xbf16, #tpu.memory_space<vmem>>) attributes {dimension_semantics = [#tpu.dimension_semantics<parallel>], iteration_bounds = array<i64: 2>, scalar_prefetch = 0 : i64, scratch_operands = 0 : i64, tpu.core_type = #tpu.core_type<tc>, window_params = [{transform_indices = @transform_0, window_bounds = array<i64: 1, 16, 48>}, {pipeline_mode = #tpu.pipeline_mode<synchronous>, transform_indices = @transform_1, window_bounds = array<i64: 48, 16>}, {pipeline_mode = #tpu.pipeline_mode<synchronous>, transform_indices = @transform_2, window_bounds = array<i64: 48, 120>}, {transform_indices = @transform_3, window_bounds = array<i64: 1, 48, 120>}]} {
    %c0 = arith.constant 0 : index
    %c0_0 = arith.constant 0 : index
    %c0_1 = arith.constant 0 : index
    %0 = vector.load %arg1[%c0, %c0_0, %c0_1] : memref<1x16x48xf32, #tpu.memory_space<vmem>>, vector<1x16x48xf32>
    %1 = vector.shape_cast %0 : vector<1x16x48xf32> to vector<16x48xf32>
    %c0_2 = arith.constant 0 : index
    %c0_3 = arith.constant 0 : index
    %2 = vector.load %arg3[%c0_2, %c0_3] : memref<48x120xf32, #tpu.memory_space<vmem>>, vector<48x120xf32>
    %cst = arith.constant dense<0.000000e+00> : vector<16x120xf32>
    %3 = tpu.matmul %1, %2, %cst {dimension_numbers = #tpu.dot_dimension_numbers<[1], [0], [0], [1], [0, 0, 1, 1], [], []>} : vector<16x48xf32>, vector<48x120xf32>, vector<16x120xf32> -> vector<16x120xf32>
    %c0_4 = arith.constant 0 : index
    %c0_5 = arith.constant 0 : index
    %4 = vector.load %arg2[%c0_4, %c0_5] : memref<48x16xf32, #tpu.memory_space<vmem>>, vector<48x16xf32>
    %cst_6 = arith.constant dense<0.000000e+00> : vector<48x120xf32>
    %5 = tpu.matmul %4, %3, %cst_6 {dimension_numbers = #tpu.dot_dimension_numbers<[1], [0], [0], [1], [0, 0, 1, 1], [], []>} : vector<48x16xf32>, vector<16x120xf32>, vector<48x120xf32> -> vector<48x120xf32>
    %6 = arith.truncf %5 : vector<48x120xf32> to vector<48x120xbf16>
    %c0_7 = arith.constant 0 : index
    %c0_8 = arith.constant 0 : index
    %c0_9 = arith.constant 0 : index
    %7 = vector.load %arg4[%c0_7, %c0_8, %c0_9] : memref<1x48x120xbf16, #tpu.memory_space<vmem>>, vector<1x48x120xbf16>
    %8 = vector.shape_cast %7 : vector<1x48x120xbf16> to vector<48x120xbf16>
    %9 = vector.shape_cast %6 : vector<48x120xbf16> to vector<1x48x120xbf16>
    tpu.vector_store %arg4[%c0_7, %c0_8, %c0_9], %9 {strides = array<i32>} : memref<1x48x120xbf16, #tpu.memory_space<vmem>>, vector<1x48x120xbf16>,
    return
  }
  func.func @transform_0(%arg0: i32) -> (i32, i32, i32) {
    %c0_i32 = arith.constant 0 : i32
    %c0_i32_0 = arith.constant 0 : i32
    %c0_i32_1 = arith.constant 0 : i32
    return %arg0, %c0_i32, %c0_i32_0 : i32, i32, i32
  }
  func.func @transform_1(%arg0: i32) -> (i32, i32) {
    %c0_i32 = arith.constant 0 : i32
    %c0_i32_0 = arith.constant 0 : i32
    %c0_i32_1 = arith.constant 0 : i32
    return %c0_i32, %c0_i32_0 : i32, i32
  }
  func.func @transform_2(%arg0: i32) -> (i32, i32) {
    %c0_i32 = arith.constant 0 : i32
    %c0_i32_0 = arith.constant 0 : i32
    %c0_i32_1 = arith.constant 0 : i32
    return %c0_i32, %c0_i32_0 : i32, i32
  }
  func.func @transform_3(%arg0: i32) -> (i32, i32, i32) {
    %c0_i32 = arith.constant 0 : i32
    %c0_i32_0 = arith.constant 0 : i32
    %c0_i32_1 = arith.constant 0 : i32
    return %arg0, %c0_i32, %c0_i32_0 : i32, i32, i32
  }
}

</mosaic_0001>

<llo_original>
// kernel: tpu_custom_call.1
$region0: #{tpu_custom_call.1}
  #allocation0 [shape = 'u32[]', space=smem, size = 0x4, offset = 0x4, fixed_abs, tag = 'smem constant byte address 0x4 - core index']
  #allocation1 [shape = 'u32[72,128]{1,0:T(1,128)}', space=vmem, size = 0x9000, scoped, tag = 'internal scratch']
  %s0 = inlined_call_operand.hbm [shape: f32[2,16,48], index: 0, kind: input, shape index: {}]
  %s1 = inlined_call_operand.hbm [shape: f32[48,16], index: 1, kind: input, shape index: {}]
  %s2 = inlined_call_operand.hbm [shape: f32[48,120], index: 2, kind: input, shape index: {}]
  %s3 = inlined_call_operand.hbm [shape: bf16[2,48,120], index: 3, kind: output, shape index: {}]
  %s4 = sld [smem:[#allocation0]]
  $region57: #{tpu_custom_call.1} parent=0
    _
  %s6 = ssub.s32 1, %s4
  %s7 = scalar_select 0, %s6, %s4
  $region1: #{tpu_custom_call.1} parent=0
    #allocation2 [shape = 'u8[16384]{0}', space=vmem, size = 0x4000, scoped, tag = 'input window, operand 0']
    #allocation3 [shape = 's32[2]{0}', space=sflag, size = 0x8, scoped, tag = 'scoped memory for tpu_custom_call.1']
    #allocation4 [shape = 's32[2]{0}', space=sflag, size = 0x8, scoped, tag = 'scoped memory for tpu_custom_call.1']
    #allocation5 [shape = 'u8[24576]{0}', space=vmem, size = 0x6000, scoped, tag = 'input window, operand 1, single buffered']
    #allocation6 [shape = 's32[1]{0}', space=sflag, size = 0x4, scoped, tag = 'scoped memory for tpu_custom_call.1']
    #allocation7 [shape = 'u8[24576]{0}', space=vmem, size = 0x6000, scoped, tag = 'input window, operand 2, single buffered']
    #allocation8 [shape = 'u8[24576]{0}', space=vmem, size = 0x6000, scoped, tag = 'output window, operand 0']
    %8 = vsyncpa [#allocation3], 0
    %s9 = scalar_lea.sflag [#allocation3], 1
    %10 = vsyncpa %s9, 0
    %11 = vsyncpa [#allocation6], 0
    %12 = vsyncpa [#allocation4], 0
    %s13 = scalar_lea.sflag [#allocation4], 1
    %14 = vsyncpa %s13, 0
    loop: start=0, step=1, limit=4
    $region2: #{tpu_custom_call.1} parent=1 // loop_pre_header
      _
    $region3: #{tpu_custom_call.1} parent=1 // loop_header
      %s16 = sphi 0, %s20
      %p17 = scmp.ge.s32.totalorder %s16, 4
      %s26 = sphi 0, %s28
      %s29 = sphi 0, %s26
      %s30 = sphi 0, %s29
      %s46 = sphi 0, %s30
      %s50 = sphi 0, %s50
      %s52 = sphi 0, %s50
      %s53 = sphi 0, %s52
      %s67 = sphi 0, %s53
      %s71 = sphi 0, %s71
      %s73 = sphi 0, %s71
      %s74 = sphi 0, %s73
      %s88 = sphi 0, %s74
      %s94 = sphi 0, %s96
      %s97 = sphi 0, %s94
      %s98 = sphi 0, %s97
      %s114 = sphi 0, %s98
    $region4: #{tpu_custom_call.1} parent=1 // loop_header_branch
      %19 = sbr.rel (%p17) target = $region8
    $region5: #{tpu_custom_call.1} parent=1 // loop_body
      %s21 = ssub.s32 %s16, 1
      %s22 = ssub.s32 %s16, 2
      %s23 = sadd.s32 %s16, 1
      %s24 = ssub.s32 %s16, %s23
      %p25 = scmp.eq.s32.totalorder %s24, 0
      %s27 = sadd.s32 %s26, 1
      %s28 = scalar_select %p25, %s26, %s27
      %p31 = pneg %p25
      %p32 = scmp.eq.s32.totalorder %s16, 1
      %p33 = por %p31, %p32
      %p34 = scmp.ne.s32.totalorder %s26, %s29
      %p35 = scmp.eq.s32.totalorder %s16, 0
      %p36 = por %p34, %p35
      %p37 = scmp.ne.s32.totalorder %s26, %s29
      %p38 = scmp.eq.s32.totalorder %s21, 1
      %p39 = por %p37, %p38
      %p40 = scmp.ne.s32.totalorder %s29, %s30
      %p41 = scmp.eq.s32.totalorder %s21, 0
      %p42 = por %p40, %p41
      %p43 = scmp.ne.s32.totalorder %s29, %s30
      %p44 = scmp.eq.s32.totalorder %s22, 1
      %p45 = por %p43, %p44
      %p47 = scmp.ne.s32.totalorder %s30, %s46
      %p48 = scmp.eq.s32.totalorder %s22, 0
      %p49 = por %p47, %p48
      %s51 = sadd.s32 %s50, 1
      %p54 = scmp.eq.s32.totalorder %s16, 1
      %p55 = scmp.ne.s32.totalorder %s50, %s52
      %p56 = scmp.eq.s32.totalorder %s16, 0
      %p57 = por %p55, %p56
      %p58 = scmp.ne.s32.totalorder %s50, %s52
      %p59 = scmp.eq.s32.totalorder %s21, 1
      %p60 = por %p58, %p59
      %p61 = scmp.ne.s32.totalorder %s52, %s53
      %p62 = scmp.eq.s32.totalorder %s21, 0
      %p63 = por %p61, %p62
      %p64 = scmp.ne.s32.totalorder %s52, %s53
      %p65 = scmp.eq.s32.totalorder %s22, 1
      %p66 = por %p64, %p65
      %p68 = scmp.ne.s32.totalorder %s53, %s67
      %p69 = scmp.eq.s32.totalorder %s22, 0
      %p70 = por %p68, %p69
      %s72 = sadd.s32 %s71, 1
      %p75 = scmp.eq.s32.totalorder %s16, 1
      %p76 = scmp.ne.s32.totalorder %s71, %s73
      %p77 = scmp.eq.s32.totalorder %s16, 0
      %p78 = por %p76, %p77
      %p79 = scmp.ne.s32.totalorder %s71, %s73
      %p80 = scmp.eq.s32.totalorder %s21, 1
      %p81 = por %p79, %p80
      %p82 = scmp.ne.s32.totalorder %s73, %s74
      %p83 = scmp.eq.s32.totalorder %s21, 0
      %p84 = por %p82, %p83
      %p85 = scmp.ne.s32.totalorder %s73, %s74
      %p86 = scmp.eq.s32.totalorder %s22, 1
      %p87 = por %p85, %p86
      %p89 = scmp.ne.s32.totalorder %s74, %s88
      %p90 = scmp.eq.s32.totalorder %s22, 0
      %p91 = por %p89, %p90
      %s92 = ssub.s32 %s16, %s23
      %p93 = scmp.eq.s32.totalorder %s92, 0
      %s95 = sadd.s32 %s94, 1
      %s96 = scalar_select %p93, %s94, %s95
      %p99 = pneg %p93
      %p100 = scmp.eq.s32.totalorder %s16, 1
      %p101 = por %p99, %p100
      %p102 = scmp.ne.s32.totalorder %s94, %s97
      %p103 = scmp.eq.s32.totalorder %s16, 0
      %p104 = por %p102, %p103
      %p105 = scmp.ne.s32.totalorder %s94, %s97
      %p106 = scmp.eq.s32.totalorder %s21, 1
      %p107 = por %p105, %p106
      %p108 = scmp.ne.s32.totalorder %s97, %s98
      %p109 = scmp.eq.s32.totalorder %s21, 0
      %p110 = por %p108, %p109
      %p111 = scmp.ne.s32.totalorder %s97, %s98
      %p112 = scmp.eq.s32.totalorder %s22, 1
      %p113 = por %p111, %p112
      %p115 = scmp.ne.s32.totalorder %s98, %s114
      %p116 = scmp.eq.s32.totalorder %s22, 0
      %p117 = por %p115, %p116
      %p118 = scmp.le.s32.totalorder 1, %s16
      %p119 = scmp.lt.s32.totalorder %s16, 3
      %p120 = pnand %p118, %p119
      %p121 = pneg %p120
      // Predicated region
      $region9: #{tpu_custom_call.1} parent=5 // pred_check
        _
      $region10: #{tpu_custom_call.1} parent=5 // pred_check_branch
        %123 = sbr.rel (%p120) target = $region12
      $region11: #{tpu_custom_call.1} parent=5 // pred_region
        %s124 = ssub.s32 %s16, 1
        // Predicated region
        $region13: #{tpu_custom_call.1} parent=11 // pred_check
          %p125 = pneg %p63
        $region14: #{tpu_custom_call.1} parent=11 // pred_check_branch
          %127 = sbr.rel (%p125) target = $region16
        $region15: #{tpu_custom_call.1} parent=11 // pred_region
          %129 = vsyncadd [#allocation6], 0
          %s130 = sshll.u32 %s1, 4
          %s131 = int_to_ptr.hbm [resolvable:$true] %s130
          %s132 = sshll.u32 [#allocation5], 4
          %s133 = int_to_ptr.vmem [resolvable:$true] %s132
          %138 = dma.hbm_to_vmem [thread:$0]  %s131, 768, %s133, [#allocation6], 128, 128, 8
        $region16: #{tpu_custom_call.1} parent=11 // pred_fallthru
          _
        // Predicated region
        $region17: #{tpu_custom_call.1} parent=11 // pred_check
          %p139 = pneg %p84
        $region18: #{tpu_custom_call.1} parent=11 // pred_check_branch
          %141 = sbr.rel (%p139) target = $region20
        $region19: #{tpu_custom_call.1} parent=11 // pred_region
          %143 = vsyncadd [#allocation6], 0
          %s144 = sshll.u32 %s2, 4
          %s145 = int_to_ptr.hbm [resolvable:$true] %s144
          %s146 = sshll.u32 [#allocation7], 4
          %s147 = int_to_ptr.vmem [resolvable:$true] %s146
          %152 = dma.hbm_to_vmem [thread:$0]  %s145, 768, %s147, [#allocation6], 128, 128, 8
        $region20: #{tpu_custom_call.1} parent=11 // pred_fallthru
          _
      $region12: #{tpu_custom_call.1} parent=5 // pred_fallthru
        _
      %p153 = scmp.lt.s32.totalorder %s16, 2
      // Predicated region
      $region21: #{tpu_custom_call.1} parent=5 // pred_check
        %p154 = pneg %p153
      $region22: #{tpu_custom_call.1} parent=5 // pred_check_branch
        %156 = sbr.rel (%p154) target = $region24
      $region23: #{tpu_custom_call.1} parent=5 // pred_region
        // Predicated region
        $region25: #{tpu_custom_call.1} parent=23 // pred_check
          %p157 = pneg %p36
        $region26: #{tpu_custom_call.1} parent=23 // pred_check_branch
          %159 = sbr.rel (%p157) target = $region28
        $region27: #{tpu_custom_call.1} parent=23 // pred_region
          %s160 = sand.u32 %s26, 1
          %s161 = scalar_lea.sflag [#allocation3], %s160
          %s162 = sand.u32 %s26, 1
          %s163 = smul.addr %s162, 16
          %s164 = scalar_lea.vmem [#allocation2], %s163
          %166 = vsyncadd %s161, 0
          %s167 = smul.addr %s16, 2
          %s168 = smul.addr %s167, 8
          %s169 = scalar_lea.hbm %s0, %s168
          %s170 = sshll.u32 %s169, 4
          %s171 = int_to_ptr.hbm [resolvable:$true] %s170
          %s172 = sshll.u32 %s164, 4
          %s173 = int_to_ptr.vmem [resolvable:$true] %s172
          %178 = dma.hbm_to_vmem [thread:$0]  %s171, 256, %s173, %s161, 128, 128, 8
        $region28: #{tpu_custom_call.1} parent=23 // pred_fallthru
          _
      $region24: #{tpu_custom_call.1} parent=5 // pred_fallthru
        _
      %p179 = scmp.le.s32.totalorder 1, %s16
      %p180 = scmp.lt.s32.totalorder %s16, 3
      %p181 = pnand %p179, %p180
      %p182 = pneg %p181
      // Predicated region
      $region29: #{tpu_custom_call.1} parent=5 // pred_check
        _
      $region30: #{tpu_custom_call.1} parent=5 // pred_check_branch
        %184 = sbr.rel (%p181) target = $region32
      $region31: #{tpu_custom_call.1} parent=5 // pred_region
        %s185 = ssub.s32 %s16, 1
        %s186 = sand.u32 %s29, 1
        %s187 = scalar_lea.sflag [#allocation3], %s186
        %s188 = sand.u32 %s29, 1
        %s189 = smul.addr %s188, 16
        %s190 = scalar_lea.vmem [#allocation2], %s189
        // Predicated region
        $region33: #{tpu_custom_call.1} parent=31 // pred_check
          %p191 = pneg %p42
        $region34: #{tpu_custom_call.1} parent=31 // pred_check_branch
          %193 = sbr.rel (%p191) target = $region36
        $region35: #{tpu_custom_call.1} parent=31 // pred_region
          %195 = dma.done %s187, 256
        $region36: #{tpu_custom_call.1} parent=31 // pred_fallthru
          _
        // Predicated region
        $region37: #{tpu_custom_call.1} parent=31 // pred_check
          %p196 = pneg %p63
        $region38: #{tpu_custom_call.1} parent=31 // pred_check_branch
          %198 = sbr.rel (%p196) target = $region40
        $region39: #{tpu_custom_call.1} parent=31 // pred_region
          %200 = dma.done [#allocation6], 768
        $region40: #{tpu_custom_call.1} parent=31 // pred_fallthru
          _
        // Predicated region
        $region41: #{tpu_custom_call.1} parent=31 // pred_check
          %p201 = pneg %p84
        $region42: #{tpu_custom_call.1} parent=31 // pred_check_branch
          %203 = sbr.rel (%p201) target = $region44
        $region43: #{tpu_custom_call.1} parent=31 // pred_region
          %205 = dma.done [#allocation6], 768
        $region44: #{tpu_custom_call.1} parent=31 // pred_fallthru
          _
        %s206 = sand.u32 %s29, 1
        %s207 = scalar_lea.sflag [#allocation3], %s206
        %s208 = sand.u32 %s29, 1
        %s209 = smul.addr %s208, 16
        %s210 = scalar_lea.vmem [#allocation2], %s209
        %p211 = pneg %p42
        %p212 = pneg %p39
        %p213 = pneg %p63
        %p214 = pneg %p60
        %p215 = pneg %p84
        %p216 = pneg %p81
        %p217 = pneg %p110
        %p218 = pneg %p107
        %s219 = sand.u32 %s97, 1
        %s220 = scalar_lea.sflag [#allocation4], %s219
        %s221 = sand.u32 %s97, 1
        %s222 = smul.addr %s221, 24
        %s223 = scalar_lea.vmem [#allocation8], %s222
        %v224 = vld [vmem:[%s190] sm:$0xff]
        %v225 = vld [vmem:[%s190 + $0x8] sm:$0xff]
        %v226 = vld [vmem:[#allocation7] sm:$0xff]
        %v227 = vld [vmem:[#allocation7 + $0x8] sm:$0xff]
        %v228 = vld [vmem:[#allocation7 + $0x10] sm:$0xff]
        %v229 = vld [vmem:[#allocation7 + $0x18] sm:$0xff]
        %v230 = vld [vmem:[#allocation7 + $0x20] sm:$0xff]
        %v231 = vld [vmem:[#allocation7 + $0x28] sm:$0xff]
        %vm232 = vcmask 392192
        %v234 = vsel %vm232, %v224, 0
        %v237 = vsel %vm232, %v225, 0
        %239 = vmatpush.msra.mxu0 0.0
        %240 = vmatpush.msra.mxu0 0.0
        %241 = vmatpush.msra.mxu0 0.0
        %242 = vmatpush.msra.mxu0 0.0
        %243 = vmatpush.msra.mxu0 0.0
        %244 = vmatpush.msra.mxu0 0.0
        %245 = vmatpush.msra.mxu0 0.0
        %246 = vmatpush.msra.mxu0 0.0
        %247 = vmatpush.msra.mxu0 0.0
        %248 = vmatpush.msra.mxu0 0.0
        %249 = vmatpush.msra.mxu0 %v231
        %250 = vmatpush.msra.mxu0 %v230
        %251 = vmatpush.msra.mxu0 %v229
        %252 = vmatpush.msra.mxu0 %v228
        %253 = vmatpush.msra.mxu0 %v227
        %254 = vmatpush.msra.mxu0 %v226
        %255 = vmatmul.f32.gmra.mxu0 %v234
        %v256 = vpop.f32.mrf.mxu0
        %v257 = vadd.f32 0.0, %v256
        %258 = vmatmul.f32.gmra.mxu0 %v237
        %v259 = vpop.f32.mrf.mxu0
        %v260 = vadd.f32 0.0, %v259
        %261 = vdwg.mxu0
        %v262 = vld [vmem:[#allocation5] sm:$0xff]
        %v263 = vld [vmem:[#allocation5 + $0x8] sm:$0xff]
        %v264 = vld [vmem:[#allocation5 + $0x10] sm:$0xff]
        %v265 = vld [vmem:[#allocation5 + $0x18] sm:$0xff]
        %v266 = vld [vmem:[#allocation5 + $0x20] sm:$0xff]
        %v267 = vld [vmem:[#allocation5 + $0x28] sm:$0xff]
        %vm268 = vcmask 130048
        %v270 = vsel %vm268, %v262, 0
        %v273 = vsel %vm268, %v263, 0
        %v276 = vsel %vm268, %v264, 0
        %v279 = vsel %vm268, %v265, 0
        %v282 = vsel %vm268, %v266, 0
        %v285 = vsel %vm268, %v267, 0
        %287 = vmatpush.msra.mxu0 0.0
        %288 = vmatpush.msra.mxu0 0.0
        %289 = vmatpush.msra.mxu0 0.0
        %290 = vmatpush.msra.mxu0 0.0
        %291 = vmatpush.msra.mxu0 0.0
        %292 = vmatpush.msra.mxu0 0.0
        %293 = vmatpush.msra.mxu0 0.0
        %294 = vmatpush.msra.mxu0 0.0
        %295 = vmatpush.msra.mxu0 0.0
        %296 = vmatpush.msra.mxu0 0.0
        %297 = vmatpush.msra.mxu0 0.0
        %298 = vmatpush.msra.mxu0 0.0
        %299 = vmatpush.msra.mxu0 0.0
        %300 = vmatpush.msra.mxu0 0.0
        %301 = vmatpush.msra.mxu0 %v260
        %302 = vmatpush.msra.mxu0 %v257
        %303 = vmatmul.f32.gmra.mxu0 %v270
        %v304 = vpop.f32.mrf.mxu0
        %v305 = vadd.f32 0.0, %v304
        %306 = vmatmul.f32.gmra.mxu0 %v273
        %v307 = vpop.f32.mrf.mxu0
        %v308 = vadd.f32 0.0, %v307
        %309 = vmatmul.f32.gmra.mxu0 %v276
        %v310 = vpop.f32.mrf.mxu0
        %v311 = vadd.f32 0.0, %v310
        %312 = vmatmul.f32.gmra.mxu0 %v279
        %v313 = vpop.f32.mrf.mxu0
        %v314 = vadd.f32 0.0, %v313
        %315 = vmatmul.f32.gmra.mxu0 %v282
        %v316 = vpop.f32.mrf.mxu0
        %v317 = vadd.f32 0.0, %v316
        %318 = vmatmul.f32.gmra.mxu0 %v285
        %v319 = vpop.f32.mrf.mxu0
        %v320 = vadd.f32 0.0, %v319
        %321 = vdwg.mxu0
        %v322 = vpack.c.bf16 %v305, %v305
        %v323 = vpack.c.bf16 %v308, %v308
        %v324 = vpack.c.bf16 %v311, %v311
        %v325 = vpack.c.bf16 %v314, %v314
        %v326 = vpack.c.bf16 %v317, %v317
        %v327 = vpack.c.bf16 %v320, %v320
        %vm328 = vcmask 977920
        %329 = vst.msk [vmem:[%s223] sm:$0xf] %vm328, %v322
        %330 = vst.msk [vmem:[%s223 + $0x4] sm:$0xf] %vm328, %v323
        %331 = vst.msk [vmem:[%s223 + $0x8] sm:$0xf] %vm328, %v324
        %332 = vst.msk [vmem:[%s223 + $0xc] sm:$0xf] %vm328, %v325
        %333 = vst.msk [vmem:[%s223 + $0x10] sm:$0xf] %vm328, %v326
        %334 = vst.msk [vmem:[%s223 + $0x14] sm:$0xf] %vm328, %v327
        %s335 = sand.u32 %s97, 1
        %s336 = scalar_lea.sflag [#allocation4], %s335
        %s337 = sand.u32 %s97, 1
        %s338 = smul.addr %s337, 24
        %s339 = scalar_lea.vmem [#allocation8], %s338
        // Predicated region
        $region45: #{tpu_custom_call.1} parent=31 // pred_check
          %p340 = pneg %p107
        $region46: #{tpu_custom_call.1} parent=31 // pred_check_branch
          %342 = sbr.rel (%p340) target = $region48
        $region47: #{tpu_custom_call.1} parent=31 // pred_region
          %344 = vsyncadd %s336, 0
          %s345 = smul.addr %s21, 6
          %s346 = smul.addr %s345, 4
          %s347 = scalar_lea.hbm %s3, %s346
          %s348 = sshll.u32 %s339, 4
          %s349 = int_to_ptr.vmem [resolvable:$true] %s348
          %s350 = sshll.u32 %s347, 4
          %s351 = int_to_ptr.hbm [resolvable:$true] %s350
          %356 = dma.vmem_to_hbm [thread:$0]  %s349, 384, %s351, %s336, 64, 64, 4
        $region48: #{tpu_custom_call.1} parent=31 // pred_fallthru
          _
      $region32: #{tpu_custom_call.1} parent=5 // pred_fallthru
        _
      %p357 = scmp.le.s32.totalorder 2, %s16
      // Predicated region
      $region49: #{tpu_custom_call.1} parent=5 // pred_check
        %p358 = pneg %p357
      $region50: #{tpu_custom_call.1} parent=5 // pred_check_branch
        %360 = sbr.rel (%p358) target = $region52
      $region51: #{tpu_custom_call.1} parent=5 // pred_region
        %s361 = ssub.s32 %s16, 2
        // Predicated region
        $region53: #{tpu_custom_call.1} parent=51 // pred_check
          %p362 = pneg %p113
        $region54: #{tpu_custom_call.1} parent=51 // pred_check_branch
          %364 = sbr.rel (%p362) target = $region56
        $region55: #{tpu_custom_call.1} parent=51 // pred_region
          %s365 = sand.u32 %s98, 1
          %s366 = scalar_lea.sflag [#allocation4], %s365
          %s367 = sand.u32 %s98, 1
          %s368 = smul.addr %s367, 24
          %s369 = scalar_lea.vmem [#allocation8], %s368
          %371 = dma.done %s366, 384
        $region56: #{tpu_custom_call.1} parent=51 // pred_fallthru
          _
      $region52: #{tpu_custom_call.1} parent=5 // pred_fallthru
        _
    $region6: #{tpu_custom_call.1} parent=1 // loop_footer
      %s20 = sadd.s32 1, %s16
    $region7: #{tpu_custom_call.1} parent=1 // loop_footer_branch
      %15 = sbr.rel target = $region3
    $region8: #{tpu_custom_call.1} parent=1 // loop_exit
      _
    %372 = vsyncpa [#allocation3], 1
    %s373 = scalar_lea.sflag [#allocation3], 1
    %374 = vsyncpa %s373, 1
    %375 = vsyncpa [#allocation6], 1
    %376 = vsyncpa [#allocation4], 1
    %s377 = scalar_lea.sflag [#allocation4], 1
    %378 = vsyncpa %s377, 1

</llo_original>
